<compile_context>
chip_gen: v7x
topology: tpu7x:2x2x1
jax: 0.10.0
libtpu: 0.0.40
codegen_flags: <defaults>
</compile_context>

<pallas_src>
import jax
import jax.numpy as jnp
from jax.experimental import pallas as pl
from jax.experimental.pallas import tpu as pltpu


def _softplus(v):
    # Numerically robust softplus (== log(1+exp(v)); robust for large v).
    return jnp.maximum(v, 0.0) + jnp.log(1.0 + jnp.exp(-jnp.abs(v)))


def _vmem_capacity_bytes():
    # Conservative default = v7x per-TensorCore VMEM (64 MiB).
    try:
        return int(pltpu.get_tpu_info().vmem_capacity_bytes)
    except Exception:
        return 64 * 1024 * 1024


def _pick_pack(input_dim, hidden, out_cols):
    """Rows-per-lane-row pack factor: make packed in/out widths lane-dense."""
    pack = max(1, pl.cdiv(128, max(1, min(input_dim, out_cols))))
    pack = int(pl.next_power_of_2(int(pack)))
    pack = min(pack, 128)
    # Keep the block-diagonal weights comfortably VMEM-resident (< 8 MiB).
    while pack > 1 and 4 * pack * pack * (input_dim * hidden + hidden * out_cols) > (8 << 20):
        pack //= 2
    return pack


# ---------------------------------------------------------------------------
# Bayesian sampling + exact KL (tiny; plain JAX per perf review)
# ---------------------------------------------------------------------------
def _sample_and_kl(params, eps):
    def kl_term(mu, std):
        # Exact KL vs N(0,1), algebraically identical to the PyTorch formula:
        #  0.5*sum(log(1/std^2)) - 0.5*numel + 0.5*sum(std^2) + 0.5*sum(mu^2)
        return (-jnp.sum(jnp.log(std)) - 0.5 * mu.size
                + 0.5 * jnp.sum(std * std) + 0.5 * jnp.sum(mu * mu))

    def layer(mu_w, rho_w, e_w, mu_b, rho_b, e_b):
        std_w = _softplus(rho_w)
        std_b = _softplus(rho_b)
        w = mu_w + e_w * std_w
        b = mu_b + e_b * std_b
        return w, b, kl_term(mu_w, std_w) + kl_term(mu_b, std_b)

    w1, b1, kl1 = layer(params["w1_mu"], params["w1_rho"], eps["w1"],
                        params["b1_mu"], params["b1_rho"], eps["b1"])
    w2, b2, kl2 = layer(params["w2_mu"], params["w2_rho"], eps["w2"],
                        params["b2_mu"], params["b2_rho"], eps["b2"])
    return w1, b1, w2, b2, kl1 + kl2


# ---------------------------------------------------------------------------
# Batch-streaming MLP kernel: matmul + bias + ReLU + matmul + bias
# ---------------------------------------------------------------------------
def _mlp_kernel(x_ref, w1_ref, b1_ref, w2_ref, b2_ref, out_ref):
    h = jnp.dot(x_ref[...], w1_ref[...],
                preferred_element_type=jnp.float32) + b1_ref[...]
    h = jnp.maximum(h, 0.0)
    out_ref[...] = (jnp.dot(h, w2_ref[...],
                            preferred_element_type=jnp.float32)
                    + b2_ref[...]).astype(out_ref.dtype)


def bbp_heteroscedastic_forward(x, params, eps, *, tile_n=32768):
    """x: (..., input_dim) -> (output (N, 2*output_dim), KL scalar)."""
    input_dim, hidden = params["w1_mu"].shape
    out_cols = params["w2_mu"].shape[1]                 # 2 * output_dim
    x2d = x.reshape(-1, input_dim).astype(jnp.float32)  # x.view(-1, input_dim)
    n = x2d.shape[0]

    # ----- Bayesian sampling + exact KL (plain JAX, O(#weights) ~ 3 KiB) -----
    w1, b1, w2, b2, kl = _sample_and_kl(params, eps)

    # ----- lane-dense repack: PACK rows per lane row, block-diagonal weights ----
    pack = _pick_pack(input_dim, hidden, out_cols)
    if pack > 1:
        eye = jnp.eye(pack, dtype=jnp.float32)
        w1 = jnp.kron(eye, w1)                  # (pack*in, pack*hidden) block-diag
        w2 = jnp.kron(eye, w2)                  # (pack*hidden, pack*out) block-diag
        b1 = jnp.tile(b1, (1, pack))            # (1, pack*hidden)
        b2 = jnp.tile(b2, (1, pack))            # (1, pack*out)
    packed_in = pack * input_dim
    packed_hid = pack * hidden
    packed_out = pack * out_cols

    n_pk = int(pl.cdiv(n, pack))                # packed batch rows
    n_full = n_pk * pack
    if n_full != n:
        # TODO(synk): ragged tail (< pack rows).  For huge ragged batches run
        # the tail through a tiny separate matmul instead of this pad copy;
        # when n % pack == 0 (common) this branch (and its copy) never runs.
        x2d = jnp.pad(x2d, ((0, n_full - n), (0, 0)))
    x_pk = x2d.reshape(n_pk, packed_in)         # free row-major reshape

    # ----- batch tile selection (in packed rows) -----
    tile_rows = max(1, int(tile_n) // pack)
    if n_pk >= 64:
        # Keep >= ~8 grid steps so "parallel" can shard across v7x's two
        # TensorCores and still double-buffer per core.
        tile_rows = min(tile_rows, max(8, (n_pk // 8) // 8 * 8))
    if tile_rows >= n_pk:
        tile_rows = n_pk                        # single block == full array dim
    else:
        tile_rows = max(8, (tile_rows // 8) * 8)  # sublane alignment
        if tile_rows >= n_pk:
            tile_rows = n_pk
    grid = (int(pl.cdiv(n_pk, tile_rows)),)     # partial last block masked by Pallas

    # ----- VMEM budget (generation aware) -----
    weight_bytes = 4 * (packed_in * packed_hid + packed_hid
                        + packed_hid * packed_out + packed_out)
    tile_bytes = 4 * tile_rows * (packed_in + packed_out)     # one in + one out tile
    need = (2 * tile_bytes                                    # double-buffered tiles
            + 2 * weight_bytes                                # resident weights (2 bufs)
            + 4 * tile_rows * packed_hid                      # hidden intermediate
            + (4 << 20))                                      # headroom
    vmem_limit = int(min(max(need, 32 << 20),
                         (_vmem_capacity_bytes() * 3) // 4))

    out_pk = pl.pallas_call(
        _mlp_kernel,
        out_shape=jax.ShapeDtypeStruct((n_pk, packed_out), jnp.float32),
        grid=grid,
        in_specs=[
            pl.BlockSpec((tile_rows, packed_in), lambda i: (i, 0)),
            # resident weights / biases (constant index_map)
            pl.BlockSpec((packed_in, packed_hid), lambda i: (0, 0)),
            pl.BlockSpec((1, packed_hid), lambda i: (0, 0)),
            pl.BlockSpec((packed_hid, packed_out), lambda i: (0, 0)),
            pl.BlockSpec((1, packed_out), lambda i: (0, 0)),
        ],
        out_specs=pl.BlockSpec((tile_rows, packed_out), lambda i: (i, 0)),
        compiler_params=pltpu.CompilerParams(
            dimension_semantics=("parallel",),
            vmem_limit_bytes=vmem_limit,
        ),
        cost_estimate=pl.CostEstimate(
            flops=2 * n_pk * (packed_in * packed_hid + packed_hid * packed_out),
            transcendentals=0,
            bytes_accessed=4 * n_pk * (packed_in + packed_out) + weight_bytes,
        ),
    )(x_pk, w1, b1, w2, b2)

    out = out_pk.reshape(n_full, out_cols)      # free row-major reshape
    if n_full != n:
        out = out[:n]
    return out, kl


# ---------------------------------------------------------------------------
# Init / noise / plain-JAX reference (mirrors the PyTorch module)
# ---------------------------------------------------------------------------
def init_params(key, input_dim, num_units, output_dim):
    """Deterministic init mirroring BayesLinear_Normalq.__init__."""
    ks = jax.random.split(key, 8)
    f32 = jnp.float32
    return {
        # layer1 : (input_dim, num_units)
        "w1_mu":  jax.random.uniform(ks[0], (input_dim, num_units), f32, -0.01, 0.01),
        "w1_rho": jnp.full((input_dim, num_units), -3.0, f32),   # uniform_(-3,-3) == -3
        "b1_mu":  jax.random.uniform(ks[1], (1, num_units), f32, -0.01, 0.01),
        "b1_rho": jax.random.uniform(ks[2], (1, num_units), f32, -4.0, -3.0),
        # layer2 : (num_units, 2 * output_dim)
        "w2_mu":  jax.random.uniform(ks[3], (num_units, 2 * output_dim), f32, -0.01, 0.01),
        "w2_rho": jnp.full((num_units, 2 * output_dim), -3.0, f32),
        "b2_mu":  jax.random.uniform(ks[4], (1, 2 * output_dim), f32, -0.01, 0.01),
        "b2_rho": jax.random.uniform(ks[5], (1, 2 * output_dim), f32, -4.0, -3.0),
    }


def sample_epsilons(key, params):
    # PyTorch draws these inside forward(); here they are explicit inputs.
    ks = jax.random.split(key, 4)
    return {
        "w1": jax.random.normal(ks[0], params["w1_mu"].shape, jnp.float32),
        "b1": jax.random.normal(ks[1], params["b1_mu"].shape, jnp.float32),
        "w2": jax.random.normal(ks[2], params["w2_mu"].shape, jnp.float32),
        "b2": jax.random.normal(ks[3], params["b2_mu"].shape, jnp.float32),
    }


def _reference_forward(x, params, eps):
    """Plain-JAX reference using the *original* PyTorch formulas."""
    x2d = x.reshape(-1, params["w1_mu"].shape[0]).astype(jnp.float32)

    def layer(xin, wm, wr, we, bm, br, be):
        wstd = jnp.log(1.0 + jnp.exp(wr))
        bstd = jnp.log(1.0 + jnp.exp(br))
        out = xin @ (wm + we * wstd) + (bm + be * bstd)
        kl = 0.5 * jnp.sum(jnp.log(1.0 / (wstd ** 2))) - 0.5 * wstd.size
        kl = kl + 0.5 * jnp.sum(wstd ** 2) + 0.5 * jnp.sum(wm ** 2)
        kl = kl + 0.5 * jnp.sum(jnp.log(1.0 / (bstd ** 2))) - 0.5 * bstd.size
        kl = kl + 0.5 * jnp.sum(bstd ** 2) + 0.5 * jnp.sum(bm ** 2)
        return out, kl

    h, kl1 = layer(x2d, params["w1_mu"], params["w1_rho"], eps["w1"],
                   params["b1_mu"], params["b1_rho"], eps["b1"])
    h = jnp.maximum(h, 0.0)
    o, kl2 = layer(h, params["w2_mu"], params["w2_rho"], eps["w2"],
                   params["b2_mu"], params["b2_rho"], eps["b2"])
    return o, kl1 + kl2


if __name__ == "__main__":
    input_dim, num_units, output_dim = 16, 32, 4
    batch = 333   # not a multiple of the pack factor (16) nor of any tile

    key = jax.random.PRNGKey(0)
    k_x, k_p, k_e = jax.random.split(key, 3)

    x = jax.random.normal(k_x, (batch, input_dim), jnp.float32)
    params = init_params(k_p, input_dim, num_units, output_dim)
    eps = sample_epsilons(k_e, params)

    # Small tile (128 rows -> 8 packed rows/step) exercises the multi-step
    # grid, the pad-to-pack path and the masked partial final block.
    out, kl = bbp_heteroscedastic_forward(x, params, eps, tile_n=128)
    out = jax.block_until_ready(out)
    kl = jax.block_until_ready(kl)

    ref_out, ref_kl = _reference_forward(x, params, eps)
    assert out.shape == (batch, 2 * output_dim)
    assert jnp.allclose(out, ref_out, atol=1e-4, rtol=1e-4)
    assert jnp.allclose(kl, ref_kl, atol=1e-3, rtol=1e-4)

    # Also exercise the default large-tile path (single full-array block here).
    out2, kl2 = bbp_heteroscedastic_forward(x, params, eps)
    out2 = jax.block_until_ready(out2)
    assert jnp.allclose(out2, ref_out, atol=1e-4, rtol=1e-4)

    print("KERNEL_OK")
</pallas_src>

<mosaic_0001>
module attributes {stable_mosaic.version = 11 : i64} {
  func.func @_mlp_kernel(%arg0: i32, %arg1: memref<8x256xf32, #tpu.memory_space<vmem>>, %arg2: memref<256x512xf32, #tpu.memory_space<vmem>>, %arg3: memref<1x512xf32, #tpu.memory_space<vmem>>, %arg4: memref<512x128xf32, #tpu.memory_space<vmem>>, %arg5: memref<1x128xf32, #tpu.memory_space<vmem>>, %arg6: memref<8x128xf32, #tpu.memory_space<vmem>>) attributes {dimension_semantics = [#tpu.dimension_semantics<parallel>], iteration_bounds = array<i64: 3>, scalar_prefetch = 0 : i64, scratch_operands = 0 : i64, tpu.core_type = #tpu.core_type<tc>, window_params = [{transform_indices = @transform_0, window_bounds = array<i64: 8, 256>}, {pipeline_mode = #tpu.pipeline_mode<synchronous>, transform_indices = @transform_1, window_bounds = array<i64: 256, 512>}, {pipeline_mode = #tpu.pipeline_mode<synchronous>, transform_indices = @transform_2, window_bounds = array<i64: 1, 512>}, {pipeline_mode = #tpu.pipeline_mode<synchronous>, transform_indices = @transform_3, window_bounds = array<i64: 512, 128>}, {pipeline_mode = #tpu.pipeline_mode<synchronous>, transform_indices = @transform_4, window_bounds = array<i64: 1, 128>}, {transform_indices = @transform_5, window_bounds = array<i64: 8, 128>}]} {
    %c0 = arith.constant 0 : index
    %c0_0 = arith.constant 0 : index
    %0 = vector.load %arg1[%c0, %c0_0] : memref<8x256xf32, #tpu.memory_space<vmem>>, vector<8x256xf32>
    %c0_1 = arith.constant 0 : index
    %c0_2 = arith.constant 0 : index
    %1 = vector.load %arg2[%c0_1, %c0_2] : memref<256x512xf32, #tpu.memory_space<vmem>>, vector<256x512xf32>
    %cst = arith.constant dense<0.000000e+00> : vector<8x512xf32>
    %2 = tpu.matmul %0, %1, %cst {dimension_numbers = #tpu.dot_dimension_numbers<[1], [0], [0], [1], [0, 0, 1, 1], [], []>} : vector<8x256xf32>, vector<256x512xf32>, vector<8x512xf32> -> vector<8x512xf32>
    %c0_3 = arith.constant 0 : index
    %c0_4 = arith.constant 0 : index
    %3 = vector.load %arg3[%c0_3, %c0_4] : memref<1x512xf32, #tpu.memory_space<vmem>>, vector<1x512xf32>
    %4 = vector.broadcast %3 : vector<1x512xf32> to vector<8x512xf32>
    %5 = arith.addf %2, %4 : vector<8x512xf32>
    %cst_5 = arith.constant 0.000000e+00 : f32
    %6 = vector.broadcast %cst_5 : f32 to vector<8x512xf32>
    %7 = arith.maximumf %5, %6 : vector<8x512xf32>
    %c0_6 = arith.constant 0 : index
    %c0_7 = arith.constant 0 : index
    %8 = vector.load %arg4[%c0_6, %c0_7] : memref<512x128xf32, #tpu.memory_space<vmem>>, vector<512x128xf32>
    %cst_8 = arith.constant dense<0.000000e+00> : vector<8x128xf32>
    %9 = tpu.matmul %7, %8, %cst_8 {dimension_numbers = #tpu.dot_dimension_numbers<[1], [0], [0], [1], [0, 0, 1, 1], [], []>} : vector<8x512xf32>, vector<512x128xf32>, vector<8x128xf32> -> vector<8x128xf32>
    %c0_9 = arith.constant 0 : index
    %c0_10 = arith.constant 0 : index
    %10 = vector.load %arg5[%c0_9, %c0_10] : memref<1x128xf32, #tpu.memory_space<vmem>>, vector<1x128xf32>
    %11 = vector.broadcast %10 : vector<1x128xf32> to vector<8x128xf32>
    %12 = arith.addf %9, %11 : vector<8x128xf32>
    %c0_11 = arith.constant 0 : index
    %c0_12 = arith.constant 0 : index
    %13 = vector.load %arg6[%c0_11, %c0_12] : memref<8x128xf32, #tpu.memory_space<vmem>>, vector<8x128xf32>
    tpu.vector_store %arg6[%c0_11, %c0_12], %12 {strides = array<i32>} : memref<8x128xf32, #tpu.memory_space<vmem>>, vector<8x128xf32>,
    return
  }
  func.func @transform_0(%arg0: i32) -> (i32, i32) {
    %c0_i32 = arith.constant 0 : i32
    %c0_i32_0 = arith.constant 0 : i32
    return %arg0, %c0_i32 : i32, i32
  }
  func.func @transform_1(%arg0: i32) -> (i32, i32) {
    %c0_i32 = arith.constant 0 : i32
    %c0_i32_0 = arith.constant 0 : i32
    %c0_i32_1 = arith.constant 0 : i32
    return %c0_i32, %c0_i32_0 : i32, i32
  }
  func.func @transform_2(%arg0: i32) -> (i32, i32) {
    %c0_i32 = arith.constant 0 : i32
    %c0_i32_0 = arith.constant 0 : i32
    %c0_i32_1 = arith.constant 0 : i32
    return %c0_i32, %c0_i32_0 : i32, i32
  }
  func.func @transform_3(%arg0: i32) -> (i32, i32) {
    %c0_i32 = arith.constant 0 : i32
    %c0_i32_0 = arith.constant 0 : i32
    %c0_i32_1 = arith.constant 0 : i32
    return %c0_i32, %c0_i32_0 : i32, i32
  }
  func.func @transform_4(%arg0: i32) -> (i32, i32) {
    %c0_i32 = arith.constant 0 : i32
    %c0_i32_0 = arith.constant 0 : i32
    %c0_i32_1 = arith.constant 0 : i32
    return %c0_i32, %c0_i32_0 : i32, i32
  }
  func.func @transform_5(%arg0: i32) -> (i32, i32) {
    %c0_i32 = arith.constant 0 : i32
    %c0_i32_0 = arith.constant 0 : i32
    return %arg0, %c0_i32 : i32, i32
  }
}

</mosaic_0001>

<llo_original>
// kernel: tpu_custom_call.1
$region0: #{tpu_custom_call.1}
  #allocation0 [shape = 'u32[]', space=smem, size = 0x4, offset = 0x4, fixed_abs, tag = 'smem constant byte address 0x4 - core index']
  #allocation1 [shape = 'u32[144,128]{1,0:T(1,128)}', space=vmem, size = 0x12000, scoped, tag = 'internal scratch']
  %s0 = inlined_call_operand.hbm [shape: f32[21,256], index: 0, kind: input, shape index: {}]
  %s1 = inlined_call_operand.hbm [shape: f32[256,512], index: 1, kind: input, shape index: {}]
  %s2 = inlined_call_operand.vmem [shape: f32[1,512], index: 2, kind: input, shape index: {}]
  %s3 = inlined_call_operand.hbm [shape: f32[512,128], index: 3, kind: input, shape index: {}]
  %s4 = inlined_call_operand.vmem [shape: f32[1,128], index: 4, kind: input, shape index: {}]
  %s5 = inlined_call_operand.hbm [shape: f32[21,128], index: 5, kind: output, shape index: {}]
  %s6 = sld [smem:[#allocation0]]
  $region65: #{tpu_custom_call.1} parent=0
    _
  %s8 = ssub.s32 1, %s6
  %s9 = scalar_select 0, %s8, %s6
  $region1: #{tpu_custom_call.1} parent=0
    #allocation2 [shape = 'u8[16384]{0}', space=vmem, size = 0x4000, scoped, tag = 'input window, operand 0']
    #allocation3 [shape = 's32[2]{0}', space=sflag, size = 0x8, scoped, tag = 'scoped memory for tpu_custom_call.1']
    #allocation4 [shape = 's32[2]{0}', space=sflag, size = 0x8, scoped, tag = 'scoped memory for tpu_custom_call.1']
    #allocation5 [shape = 'u8[524288]{0}', space=vmem, size = 0x80000, scoped, tag = 'input window, operand 1, single buffered']
    #allocation6 [shape = 's32[1]{0}', space=sflag, size = 0x4, scoped, tag = 'scoped memory for tpu_custom_call.1']
    #allocation7 [shape = 'u8[262144]{0}', space=vmem, size = 0x40000, scoped, tag = 'input window, operand 3, single buffered']
    #allocation8 [shape = 'u8[8192]{0}', space=vmem, size = 0x2000, scoped, tag = 'output window, operand 0']
    %10 = vsyncpa [#allocation3], 0
    %s11 = scalar_lea.sflag [#allocation3], 1
    %12 = vsyncpa %s11, 0
    %13 = vsyncpa [#allocation6], 0
    %14 = vsyncpa [#allocation4], 0
    %s15 = scalar_lea.sflag [#allocation4], 1
    %16 = vsyncpa %s15, 0
    loop: start=0, step=1, limit=5
    $region2: #{tpu_custom_call.1} parent=1 // loop_pre_header
      _
    $region3: #{tpu_custom_call.1} parent=1 // loop_header
      %s18 = sphi 0, %s22
      %p19 = scmp.ge.s32.totalorder %s18, 5
      %s28 = sphi 0, %s30
      %s31 = sphi 0, %s28
      %s32 = sphi 0, %s31
      %s48 = sphi 0, %s32
      %s52 = sphi 0, %s52
      %s54 = sphi 0, %s52
      %s55 = sphi 0, %s54
      %s69 = sphi 0, %s55
      %s73 = sphi 0, %s73
      %s75 = sphi 0, %s73
      %s76 = sphi 0, %s75
      %s90 = sphi 0, %s76
      %s94 = sphi 0, %s94
      %s96 = sphi 0, %s94
      %s97 = sphi 0, %s96
      %s111 = sphi 0, %s97
      %s115 = sphi 0, %s115
      %s117 = sphi 0, %s115
      %s118 = sphi 0, %s117
      %s132 = sphi 0, %s118
      %s138 = sphi 0, %s140
      %s141 = sphi 0, %s138
      %s142 = sphi 0, %s141
      %s158 = sphi 0, %s142
    $region4: #{tpu_custom_call.1} parent=1 // loop_header_branch
      %21 = sbr.rel (%p19) target = $region8
    $region5: #{tpu_custom_call.1} parent=1 // loop_body
      %s23 = ssub.s32 %s18, 1
      %s24 = ssub.s32 %s18, 2
      %s25 = sadd.s32 %s18, 1
      %s26 = ssub.s32 %s18, %s25
      %p27 = scmp.eq.s32.totalorder %s26, 0
      %s29 = sadd.s32 %s28, 1
      %s30 = scalar_select %p27, %s28, %s29
      %p33 = pneg %p27
      %p34 = scmp.eq.s32.totalorder %s18, 2
      %p35 = por %p33, %p34
      %p36 = scmp.ne.s32.totalorder %s28, %s31
      %p37 = scmp.eq.s32.totalorder %s18, 0
      %p38 = por %p36, %p37
      %p39 = scmp.ne.s32.totalorder %s28, %s31
      %p40 = scmp.eq.s32.totalorder %s23, 2
      %p41 = por %p39, %p40
      %p42 = scmp.ne.s32.totalorder %s31, %s32
      %p43 = scmp.eq.s32.totalorder %s23, 0
      %p44 = por %p42, %p43
      %p45 = scmp.ne.s32.totalorder %s31, %s32
      %p46 = scmp.eq.s32.totalorder %s24, 2
      %p47 = por %p45, %p46
      %p49 = scmp.ne.s32.totalorder %s32, %s48
      %p50 = scmp.eq.s32.totalorder %s24, 0
      %p51 = por %p49, %p50
      %s53 = sadd.s32 %s52, 1
      %p56 = scmp.eq.s32.totalorder %s18, 2
      %p57 = scmp.ne.s32.totalorder %s52, %s54
      %p58 = scmp.eq.s32.totalorder %s18, 0
      %p59 = por %p57, %p58
      %p60 = scmp.ne.s32.totalorder %s52, %s54
      %p61 = scmp.eq.s32.totalorder %s23, 2
      %p62 = por %p60, %p61
      %p63 = scmp.ne.s32.totalorder %s54, %s55
      %p64 = scmp.eq.s32.totalorder %s23, 0
      %p65 = por %p63, %p64
      %p66 = scmp.ne.s32.totalorder %s54, %s55
      %p67 = scmp.eq.s32.totalorder %s24, 2
      %p68 = por %p66, %p67
      %p70 = scmp.ne.s32.totalorder %s55, %s69
      %p71 = scmp.eq.s32.totalorder %s24, 0
      %p72 = por %p70, %p71
      %s74 = sadd.s32 %s73, 1
      %p77 = scmp.eq.s32.totalorder %s18, 2
      %p78 = scmp.ne.s32.totalorder %s73, %s75
      %p79 = scmp.eq.s32.totalorder %s18, 0
      %p80 = por %p78, %p79
      %p81 = scmp.ne.s32.totalorder %s73, %s75
      %p82 = scmp.eq.s32.totalorder %s23, 2
      %p83 = por %p81, %p82
      %p84 = scmp.ne.s32.totalorder %s75, %s76
      %p85 = scmp.eq.s32.totalorder %s23, 0
      %p86 = por %p84, %p85
      %p87 = scmp.ne.s32.totalorder %s75, %s76
      %p88 = scmp.eq.s32.totalorder %s24, 2
      %p89 = por %p87, %p88
      %p91 = scmp.ne.s32.totalorder %s76, %s90
      %p92 = scmp.eq.s32.totalorder %s24, 0
      %p93 = por %p91, %p92
      %s95 = sadd.s32 %s94, 1
      %p98 = scmp.eq.s32.totalorder %s18, 2
      %p99 = scmp.ne.s32.totalorder %s94, %s96
      %p100 = scmp.eq.s32.totalorder %s18, 0
      %p101 = por %p99, %p100
      %p102 = scmp.ne.s32.totalorder %s94, %s96
      %p103 = scmp.eq.s32.totalorder %s23, 2
      %p104 = por %p102, %p103
      %p105 = scmp.ne.s32.totalorder %s96, %s97
      %p106 = scmp.eq.s32.totalorder %s23, 0
      %p107 = por %p105, %p106
      %p108 = scmp.ne.s32.totalorder %s96, %s97
      %p109 = scmp.eq.s32.totalorder %s24, 2
      %p110 = por %p108, %p109
      %p112 = scmp.ne.s32.totalorder %s97, %s111
      %p113 = scmp.eq.s32.totalorder %s24, 0
      %p114 = por %p112, %p113
      %s116 = sadd.s32 %s115, 1
      %p119 = scmp.eq.s32.totalorder %s18, 2
      %p120 = scmp.ne.s32.totalorder %s115, %s117
      %p121 = scmp.eq.s32.totalorder %s18, 0
      %p122 = por %p120, %p121
      %p123 = scmp.ne.s32.totalorder %s115, %s117
      %p124 = scmp.eq.s32.totalorder %s23, 2
      %p125 = por %p123, %p124
      %p126 = scmp.ne.s32.totalorder %s117, %s118
      %p127 = scmp.eq.s32.totalorder %s23, 0
      %p128 = por %p126, %p127
      %p129 = scmp.ne.s32.totalorder %s117, %s118
      %p130 = scmp.eq.s32.totalorder %s24, 2
      %p131 = por %p129, %p130
      %p133 = scmp.ne.s32.totalorder %s118, %s132
      %p134 = scmp.eq.s32.totalorder %s24, 0
      %p135 = por %p133, %p134
      %s136 = ssub.s32 %s18, %s25
      %p137 = scmp.eq.s32.totalorder %s136, 0
      %s139 = sadd.s32 %s138, 1
      %s140 = scalar_select %p137, %s138, %s139
      %p143 = pneg %p137
      %p144 = scmp.eq.s32.totalorder %s18, 2
      %p145 = por %p143, %p144
      %p146 = scmp.ne.s32.totalorder %s138, %s141
      %p147 = scmp.eq.s32.totalorder %s18, 0
      %p148 = por %p146, %p147
      %p149 = scmp.ne.s32.totalorder %s138, %s141
      %p150 = scmp.eq.s32.totalorder %s23, 2
      %p151 = por %p149, %p150
      %p152 = scmp.ne.s32.totalorder %s141, %s142
      %p153 = scmp.eq.s32.totalorder %s23, 0
      %p154 = por %p152, %p153
      %p155 = scmp.ne.s32.totalorder %s141, %s142
      %p156 = scmp.eq.s32.totalorder %s24, 2
      %p157 = por %p155, %p156
      %p159 = scmp.ne.s32.totalorder %s142, %s158
      %p160 = scmp.eq.s32.totalorder %s24, 0
      %p161 = por %p159, %p160
      %p162 = scmp.le.s32.totalorder 1, %s18
      %p163 = scmp.lt.s32.totalorder %s18, 4
      %p164 = pnand %p162, %p163
      %p165 = pneg %p164
      // Predicated region
      $region9: #{tpu_custom_call.1} parent=5 // pred_check
        _
      $region10: #{tpu_custom_call.1} parent=5 // pred_check_branch
        %167 = sbr.rel (%p164) target = $region12
      $region11: #{tpu_custom_call.1} parent=5 // pred_region
        %s168 = ssub.s32 %s18, 1
        // Predicated region
        $region13: #{tpu_custom_call.1} parent=11 // pred_check
          %p169 = pneg %p65
        $region14: #{tpu_custom_call.1} parent=11 // pred_check_branch
          %171 = sbr.rel (%p169) target = $region16
        $region15: #{tpu_custom_call.1} parent=11 // pred_region
          %s173 = ssub.s32 16384, 16384
          %174 = vsyncadd [#allocation6], %s173
          %s175 = sshll.u32 [#allocation5], 4
          %s176 = int_to_ptr.vmem [resolvable:$true] %s175
          %181 = dma.hbm_to_vmem [thread:$0]  %s1, 16384, %s176, [#allocation6], 512, 512, 32
        $region16: #{tpu_custom_call.1} parent=11 // pred_fallthru
          _
        // Predicated region
        $region17: #{tpu_custom_call.1} parent=11 // pred_check
          %p182 = pneg %p86
        $region18: #{tpu_custom_call.1} parent=11 // pred_check_branch
          %184 = sbr.rel (%p182) target = $region20
        $region19: #{tpu_custom_call.1} parent=11 // pred_region
          _
        $region20: #{tpu_custom_call.1} parent=11 // pred_fallthru
          _
        // Predicated region
        $region21: #{tpu_custom_call.1} parent=11 // pred_check
          %p185 = pneg %p107
        $region22: #{tpu_custom_call.1} parent=11 // pred_check_branch
          %187 = sbr.rel (%p185) target = $region24
        $region23: #{tpu_custom_call.1} parent=11 // pred_region
          %s189 = ssub.s32 8192, 8192
          %190 = vsyncadd [#allocation6], %s189
          %s191 = sshll.u32 [#allocation7], 4
          %s192 = int_to_ptr.vmem [resolvable:$true] %s191
          %197 = dma.hbm_to_vmem [thread:$0]  %s3, 8192, %s192, [#allocation6], 128, 128, 8
        $region24: #{tpu_custom_call.1} parent=11 // pred_fallthru
          _
        // Predicated region
        $region25: #{tpu_custom_call.1} parent=11 // pred_check
          %p198 = pneg %p128
        $region26: #{tpu_custom_call.1} parent=11 // pred_check_branch
          %200 = sbr.rel (%p198) target = $region28
        $region27: #{tpu_custom_call.1} parent=11 // pred_region
          _
        $region28: #{tpu_custom_call.1} parent=11 // pred_fallthru
          _
      $region12: #{tpu_custom_call.1} parent=5 // pred_fallthru
        _
      %p201 = scmp.lt.s32.totalorder %s18, 3
      // Predicated region
      $region29: #{tpu_custom_call.1} parent=5 // pred_check
        %p202 = pneg %p201
      $region30: #{tpu_custom_call.1} parent=5 // pred_check_branch
        %204 = sbr.rel (%p202) target = $region32
      $region31: #{tpu_custom_call.1} parent=5 // pred_region
        // Predicated region
        $region33: #{tpu_custom_call.1} parent=31 // pred_check
          %p205 = pneg %p38
        $region34: #{tpu_custom_call.1} parent=31 // pred_check_branch
          %207 = sbr.rel (%p205) target = $region36
        $region35: #{tpu_custom_call.1} parent=31 // pred_region
          %s208 = sand.u32 %s28, 1
          %s209 = scalar_lea.sflag [#allocation3], %s208
          %s210 = sand.u32 %s28, 1
          %s211 = smul.addr %s210, 16
          %s212 = scalar_lea.vmem [#allocation2], %s211
          %s214 = ssub.s32 256, 256
          %215 = vsyncadd %s209, %s214
          %s216 = smul.addr %s18, 2
          %s217 = smul.addr %s216, 128
          %s218 = scalar_lea.hbm %s0, %s217
          %s220 = sshll.u32 %s212, 4
          %s221 = int_to_ptr.vmem [resolvable:$true] %s220
          %223 = dma.hbm_to_vmem [thread:$0]  %s218, 256, %s221, %s209
        $region36: #{tpu_custom_call.1} parent=31 // pred_fallthru
          _
      $region32: #{tpu_custom_call.1} parent=5 // pred_fallthru
        _
      %p224 = scmp.le.s32.totalorder 1, %s18
      %p225 = scmp.lt.s32.totalorder %s18, 4
      %p226 = pnand %p224, %p225
      %p227 = pneg %p226
      // Predicated region
      $region37: #{tpu_custom_call.1} parent=5 // pred_check
        _
      $region38: #{tpu_custom_call.1} parent=5 // pred_check_branch
        %229 = sbr.rel (%p226) target = $region40
      $region39: #{tpu_custom_call.1} parent=5 // pred_region
        %s230 = ssub.s32 %s18, 1
        %s231 = sand.u32 %s31, 1
        %s232 = scalar_lea.sflag [#allocation3], %s231
        %s233 = sand.u32 %s31, 1
        %s234 = smul.addr %s233, 16
        %s235 = scalar_lea.vmem [#allocation2], %s234
        // Predicated region
        $region41: #{tpu_custom_call.1} parent=39 // pred_check
          %p236 = pneg %p44
        $region42: #{tpu_custom_call.1} parent=39 // pred_check_branch
          %238 = sbr.rel (%p236) target = $region44
        $region43: #{tpu_custom_call.1} parent=39 // pred_region
          %239 = dma.done %s232, 256
        $region44: #{tpu_custom_call.1} parent=39 // pred_fallthru
          _
        // Predicated region
        $region45: #{tpu_custom_call.1} parent=39 // pred_check
          %p240 = pneg %p65
        $region46: #{tpu_custom_call.1} parent=39 // pred_check_branch
          %242 = sbr.rel (%p240) target = $region48
        $region47: #{tpu_custom_call.1} parent=39 // pred_region
          %243 = dma.done [#allocation6], 16384
        $region48: #{tpu_custom_call.1} parent=39 // pred_fallthru
          _
        // Predicated region
        $region49: #{tpu_custom_call.1} parent=39 // pred_check
          %p244 = pneg %p107
        $region50: #{tpu_custom_call.1} parent=39 // pred_check_branch
          %246 = sbr.rel (%p244) target = $region52
        $region51: #{tpu_custom_call.1} parent=39 // pred_region
          %247 = dma.done [#allocation6], 8192
        $region52: #{tpu_custom_call.1} parent=39 // pred_fallthru
          _
        %s248 = sand.u32 %s31, 1
        %s249 = scalar_lea.sflag [#allocation3], %s248
        %s250 = sand.u32 %s31, 1
        %s251 = smul.addr %s250, 16
        %s252 = scalar_lea.vmem [#allocation2], %s251
        %p253 = pneg %p44
        %p254 = pneg %p41
        %p255 = pneg %p65
        %p256 = pneg %p62
        %p257 = pneg %p86
        %p258 = pneg %p83
        %p259 = pneg %p107
        %p260 = pneg %p104
        %p261 = pneg %p128
        %p262 = pneg %p125
        %p263 = pneg %p154
        %p264 = pneg %p151
        %s265 = sand.u32 %s141, 1
        %s266 = scalar_lea.sflag [#allocation4], %s265
        %s267 = sand.u32 %s141, 1
        %s268 = smul.addr %s267, 8
        %s269 = scalar_lea.vmem [#allocation8], %s268
        %v270 = vld [vmem:[%s235] sm:$0xff]
        %v271 = vld [vmem:[%s235 + $0x8] sm:$0xff]
        %v272 = vld [vmem:[#allocation5] sm:$0xff]
        %v273 = vld [vmem:[#allocation5 + $0x8] sm:$0xff]
        %v274 = vld [vmem:[#allocation5 + $0x10] sm:$0xff]
        %v275 = vld [vmem:[#allocation5 + $0x18] sm:$0xff]
        %v276 = vld [vmem:[#allocation5 + $0x20] sm:$0xff]
        %v277 = vld [vmem:[#allocation5 + $0x28] sm:$0xff]
        %v278 = vld [vmem:[#allocation5 + $0x30] sm:$0xff]
        %v279 = vld [vmem:[#allocation5 + $0x38] sm:$0xff]
        %v280 = vld [vmem:[#allocation5 + $0x40] sm:$0xff]
        %v281 = vld [vmem:[#allocation5 + $0x48] sm:$0xff]
        %v282 = vld [vmem:[#allocation5 + $0x50] sm:$0xff]
        %v283 = vld [vmem:[#allocation5 + $0x58] sm:$0xff]
        %v284 = vld [vmem:[#allocation5 + $0x60] sm:$0xff]
        %v285 = vld [vmem:[#allocation5 + $0x68] sm:$0xff]
        %v286 = vld [vmem:[#allocation5 + $0x70] sm:$0xff]
        %v287 = vld [vmem:[#allocation5 + $0x78] sm:$0xff]
        %v288 = vld [vmem:[#allocation5 + $0x80] sm:$0xff]
        %v289 = vld [vmem:[#allocation5 + $0x88] sm:$0xff]
        %v290 = vld [vmem:[#allocation5 + $0x90] sm:$0xff]
        %v291 = vld [vmem:[#allocation5 + $0x98] sm:$0xff]
        %v292 = vld [vmem:[#allocation5 + $0xa0] sm:$0xff]
        %v293 = vld [vmem:[#allocation5 + $0xa8] sm:$0xff]
        %v294 = vld [vmem:[#allocation5 + $0xb0] sm:$0xff]
        %v295 = vld [vmem:[#allocation5 + $0xb8] sm:$0xff]
        %v296 = vld [vmem:[#allocation5 + $0xc0] sm:$0xff]
        %v297 = vld [vmem:[#allocation5 + $0xc8] sm:$0xff]
        %v298 = vld [vmem:[#allocation5 + $0xd0] sm:$0xff]
        %v299 = vld [vmem:[#allocation5 + $0xd8] sm:$0xff]
        %v300 = vld [vmem:[#allocation5 + $0xe0] sm:$0xff]
        %v301 = vld [vmem:[#allocation5 + $0xe8] sm:$0xff]
        %v302 = vld [vmem:[#allocation5 + $0xf0] sm:$0xff]
        %v303 = vld [vmem:[#allocation5 + $0xf8] sm:$0xff]
        %v304 = vld [vmem:[#allocation5 + $0x100] sm:$0xff]
        %v305 = vld [vmem:[#allocation5 + $0x108] sm:$0xff]
        %v306 = vld [vmem:[#allocation5 + $0x110] sm:$0xff]
        %v307 = vld [vmem:[#allocation5 + $0x118] sm:$0xff]
        %v308 = vld [vmem:[#allocation5 + $0x120] sm:$0xff]
        %v309 = vld [vmem:[#allocation5 + $0x128] sm:$0xff]
        %v310 = vld [vmem:[#allocation5 + $0x130] sm:$0xff]
        %v311 = vld [vmem:[#allocation5 + $0x138] sm:$0xff]
        %v312 = vld [vmem:[#allocation5 + $0x140] sm:$0xff]
        %v313 = vld [vmem:[#allocation5 + $0x148] sm:$0xff]
        %v314 = vld [vmem:[#allocation5 + $0x150] sm:$0xff]
        %v315 = vld [vmem:[#allocation5 + $0x158] sm:$0xff]
        %v316 = vld [vmem:[#allocation5 + $0x160] sm:$0xff]
        %v317 = vld [vmem:[#allocation5 + $0x168] sm:$0xff]
        %v318 = vld [vmem:[#allocation5 + $0x170] sm:$0xff]
        %v319 = vld [vmem:[#allocation5 + $0x178] sm:$0xff]
        %v320 = vld [vmem:[#allocation5 + $0x180] sm:$0xff]
        %v321 = vld [vmem:[#allocation5 + $0x188] sm:$0xff]
        %v322 = vld [vmem:[#allocation5 + $0x190] sm:$0xff]
        %v323 = vld [vmem:[#allocation5 + $0x198] sm:$0xff]
        %v324 = vld [vmem:[#allocation5 + $0x1a0] sm:$0xff]
        %v325 = vld [vmem:[#allocation5 + $0x1a8] sm:$0xff]
        %v326 = vld [vmem:[#allocation5 + $0x1b0] sm:$0xff]
        %v327 = vld [vmem:[#allocation5 + $0x1b8] sm:$0xff]
        %v328 = vld [vmem:[#allocation5 + $0x1c0] sm:$0xff]
        %v329 = vld [vmem:[#allocation5 + $0x1c8] sm:$0xff]
        %v330 = vld [vmem:[#allocation5 + $0x1d0] sm:$0xff]
        %v331 = vld [vmem:[#allocation5 + $0x1d8] sm:$0xff]
        %v332 = vld [vmem:[#allocation5 + $0x1e0] sm:$0xff]
        %v333 = vld [vmem:[#allocation5 + $0x1e8] sm:$0xff]
        %v334 = vld [vmem:[#allocation5 + $0x1f0] sm:$0xff]
        %v335 = vld [vmem:[#allocation5 + $0x1f8] sm:$0xff]
        %v336 = vld [vmem:[#allocation5 + $0x200] sm:$0xff]
        %v337 = vld [vmem:[#allocation5 + $0x208] sm:$0xff]
        %v338 = vld [vmem:[#allocation5 + $0x210] sm:$0xff]
        %v339 = vld [vmem:[#allocation5 + $0x218] sm:$0xff]
        %v340 = vld [vmem:[#allocation5 + $0x220] sm:$0xff]
        %v341 = vld [vmem:[#allocation5 + $0x228] sm:$0xff]
        %v342 = vld [vmem:[#allocation5 + $0x230] sm:$0xff]
        %v343 = vld [vmem:[#allocation5 + $0x238] sm:$0xff]
        %v344 = vld [vmem:[#allocation5 + $0x240] sm:$0xff]
        %v345 = vld [vmem:[#allocation5 + $0x248] sm:$0xff]
        %v346 = vld [vmem:[#allocation5 + $0x250] sm:$0xff]
        %v347 = vld [vmem:[#allocation5 + $0x258] sm:$0xff]
        %v348 = vld [vmem:[#allocation5 + $0x260] sm:$0xff]
        %v349 = vld [vmem:[#allocation5 + $0x268] sm:$0xff]
        %v350 = vld [vmem:[#allocation5 + $0x270] sm:$0xff]
        %v351 = vld [vmem:[#allocation5 + $0x278] sm:$0xff]
        %v352 = vld [vmem:[#allocation5 + $0x280] sm:$0xff]
        %v353 = vld [vmem:[#allocation5 + $0x288] sm:$0xff]
        %v354 = vld [vmem:[#allocation5 + $0x290] sm:$0xff]
        %v355 = vld [vmem:[#allocation5 + $0x298] sm:$0xff]
        %v356 = vld [vmem:[#allocation5 + $0x2a0] sm:$0xff]
        %v357 = vld [vmem:[#allocation5 + $0x2a8] sm:$0xff]
        %v358 = vld [vmem:[#allocation5 + $0x2b0] sm:$0xff]
        %v359 = vld [vmem:[#allocation5 + $0x2b8] sm:$0xff]
        %v360 = vld [vmem:[#allocation5 + $0x2c0] sm:$0xff]
        %v361 = vld [vmem:[#allocation5 + $0x2c8] sm:$0xff]
        %v362 = vld [vmem:[#allocation5 + $0x2d0] sm:$0xff]
        %v363 = vld [vmem:[#allocation5 + $0x2d8] sm:$0xff]
        %v364 = vld [vmem:[#allocation5 + $0x2e0] sm:$0xff]
        %v365 = vld [vmem:[#allocation5 + $0x2e8] sm:$0xff]
        %v366 = vld [vmem:[#allocation5 + $0x2f0] sm:$0xff]
        %v367 = vld [vmem:[#allocation5 + $0x2f8] sm:$0xff]
        %v368 = vld [vmem:[#allocation5 + $0x300] sm:$0xff]
        %v369 = vld [vmem:[#allocation5 + $0x308] sm:$0xff]
        %v370 = vld [vmem:[#allocation5 + $0x310] sm:$0xff]
        %v371 = vld [vmem:[#allocation5 + $0x318] sm:$0xff]
        %v372 = vld [vmem:[#allocation5 + $0x320] sm:$0xff]
        %v373 = vld [vmem:[#allocation5 + $0x328] sm:$0xff]
        %v374 = vld [vmem:[#allocation5 + $0x330] sm:$0xff]
        %v375 = vld [vmem:[#allocation5 + $0x338] sm:$0xff]
        %v376 = vld [vmem:[#allocation5 + $0x340] sm:$0xff]
        %v377 = vld [vmem:[#allocation5 + $0x348] sm:$0xff]
        %v378 = vld [vmem:[#allocation5 + $0x350] sm:$0xff]
        %v379 = vld [vmem:[#allocation5 + $0x358] sm:$0xff]
        %v380 = vld [vmem:[#allocation5 + $0x360] sm:$0xff]
        %v381 = vld [vmem:[#allocation5 + $0x368] sm:$0xff]
        %v382 = vld [vmem:[#allocation5 + $0x370] sm:$0xff]
        %v383 = vld [vmem:[#allocation5 + $0x378] sm:$0xff]
        %v384 = vld [vmem:[#allocation5 + $0x380] sm:$0xff]
        %v385 = vld [vmem:[#allocation5 + $0x388] sm:$0xff]
        %v386 = vld [vmem:[#allocation5 + $0x390] sm:$0xff]
        %v387 = vld [vmem:[#allocation5 + $0x398] sm:$0xff]
        %v388 = vld [vmem:[#allocation5 + $0x3a0] sm:$0xff]
        %v389 = vld [vmem:[#allocation5 + $0x3a8] sm:$0xff]
        %v390 = vld [vmem:[#allocation5 + $0x3b0] sm:$0xff]
        %v391 = vld [vmem:[#allocation5 + $0x3b8] sm:$0xff]
        %v392 = vld [vmem:[#allocation5 + $0x3c0] sm:$0xff]
        %v393 = vld [vmem:[#allocation5 + $0x3c8] sm:$0xff]
        %v394 = vld [vmem:[#allocation5 + $0x3d0] sm:$0xff]
        %v395 = vld [vmem:[#allocation5 + $0x3d8] sm:$0xff]
        %v396 = vld [vmem:[#allocation5 + $0x3e0] sm:$0xff]
        %v397 = vld [vmem:[#allocation5 + $0x3e8] sm:$0xff]
        %v398 = vld [vmem:[#allocation5 + $0x3f0] sm:$0xff]
        %v399 = vld [vmem:[#allocation5 + $0x3f8] sm:$0xff]
        %v400 = vld [vmem:[%s2] sm:$0xf]
        %v402 = vlaneseq
        %v403 = vshrl.u32 %v402, 7
        %v404 = vsub.s32 0, %v403
        %v405 = vrot.slane %v400, %v404
        %v406 = vlaneseq
        %v407 = vshrl.u32 %v406, 7
        %v408 = vsub.s32 1, %v407
        %v409 = vrot.slane %v400, %v408
        %v410 = vlaneseq
        %v411 = vshrl.u32 %v410, 7
        %v412 = vsub.s32 2, %v411
        %v413 = vrot.slane %v400, %v412
        %v414 = vlaneseq
        %v415 = vshrl.u32 %v414, 7
        %v416 = vsub.s32 3, %v415
        %v417 = vrot.slane %v400, %v416
        %422 = vmatprep.subr.mxu0 %v273
        %423 = vmatpush1.msra.mxu0 %v272
        %424 = vmatprep.subr.mxu0 %v277
        %425 = vmatpush1.msra.mxu0 %v276
        %426 = vmatprep.subr.mxu0 %v281
        %427 = vmatpush1.msra.mxu0 %v280
        %428 = vmatprep.subr.mxu0 %v285
        %429 = vmatpush1.msra.mxu0 %v284
        %430 = vmatprep.subr.mxu0 %v289
        %431 = vmatpush1.msra.mxu0 %v288
        %432 = vmatprep.subr.mxu0 %v293
        %433 = vmatpush1.msra.mxu0 %v292
        %434 = vmatprep.subr.mxu0 %v297
        %435 = vmatpush1.msra.mxu0 %v296
        %436 = vmatprep.subr.mxu0 %v301
        %437 = vmatpush1.msra.mxu0 %v300
        %438 = vmatprep.subr.mxu0 %v305
        %439 = vmatpush1.msra.mxu0 %v304
        %440 = vmatprep.subr.mxu0 %v309
        %441 = vmatpush1.msra.mxu0 %v308
        %442 = vmatprep.subr.mxu0 %v313
        %443 = vmatpush1.msra.mxu0 %v312
        %444 = vmatprep.subr.mxu0 %v317
        %445 = vmatpush1.msra.mxu0 %v316
        %446 = vmatprep.subr.mxu0 %v321
        %447 = vmatpush1.msra.mxu0 %v320
        %448 = vmatprep.subr.mxu0 %v325
        %449 = vmatpush1.msra.mxu0 %v324
        %450 = vmatprep.subr.mxu0 %v329
        %451 = vmatpush1.msra.mxu0 %v328
        %452 = vmatprep.subr.mxu0 %v333
        %453 = vmatpush1.msra.mxu0 %v332
        %454 = vmatprep.subr.mxu0 %v337
        %455 = vmatpush1.msra.mxu0 %v336
        %456 = vmatprep.subr.mxu0 %v341
        %457 = vmatpush1.msra.mxu0 %v340
        %458 = vmatprep.subr.mxu0 %v345
        %459 = vmatpush1.msra.mxu0 %v344
        %460 = vmatprep.subr.mxu0 %v349
        %461 = vmatpush1.msra.mxu0 %v348
        %462 = vmatprep.subr.mxu0 %v353
        %463 = vmatpush1.msra.mxu0 %v352
        %464 = vmatprep.subr.mxu0 %v357
        %465 = vmatpush1.msra.mxu0 %v356
        %466 = vmatprep.subr.mxu0 %v361
        %467 = vmatpush1.msra.mxu0 %v360
        %468 = vmatprep.subr.mxu0 %v365
        %469 = vmatpush1.msra.mxu0 %v364
        %470 = vmatprep.subr.mxu0 %v369
        %471 = vmatpush1.msra.mxu0 %v368
        %472 = vmatprep.subr.mxu0 %v373
        %473 = vmatpush1.msra.mxu0 %v372
        %474 = vmatprep.subr.mxu0 %v377
        %475 = vmatpush1.msra.mxu0 %v376
        %476 = vmatprep.subr.mxu0 %v381
        %477 = vmatpush1.msra.mxu0 %v380
        %478 = vmatprep.subr.mxu0 %v385
        %479 = vmatpush1.msra.mxu0 %v384
        %480 = vmatprep.subr.mxu0 %v389
        %481 = vmatpush1.msra.mxu0 %v388
        %482 = vmatprep.subr.mxu0 %v393
        %483 = vmatpush1.msra.mxu0 %v392
        %484 = vmatprep.subr.mxu0 %v397
        %485 = vmatpush1.msra.mxu0 %v396
        %486 = vmatprep.mubr.f32.mxu0 %v271
        %487 = vmatmul.mubr.f32.gmra.mrb[0].mxu0 %v270
        %v488 = vpop.f32.mrb[0].mxu0
        %v489 = vadd.f32 %v405, %v488
        %v490 = vpop.f32.mrb[0].mxu0
        %v491 = vadd.f32 %v409, %v490
        %492 = vdwg.mxu0
        %493 = vmatprep.subr.mxu0 %v275
        %494 = vmatpush1.msra.mxu0 %v274
        %495 = vmatprep.subr.mxu0 %v279
        %496 = vmatpush1.msra.mxu0 %v278
        %497 = vmatprep.subr.mxu0 %v283
        %498 = vmatpush1.msra.mxu0 %v282
        %499 = vmatprep.subr.mxu0 %v287
        %500 = vmatpush1.msra.mxu0 %v286
        %501 = vmatprep.subr.mxu0 %v291
        %502 = vmatpush1.msra.mxu0 %v290
        %503 = vmatprep.subr.mxu0 %v295
        %504 = vmatpush1.msra.mxu0 %v294
        %505 = vmatprep.subr.mxu0 %v299
        %506 = vmatpush1.msra.mxu0 %v298
        %507 = vmatprep.subr.mxu0 %v303
        %508 = vmatpush1.msra.mxu0 %v302
        %509 = vmatprep.subr.mxu0 %v307
        %510 = vmatpush1.msra.mxu0 %v306
        %511 = vmatprep.subr.mxu0 %v311
        %512 = vmatpush1.msra.mxu0 %v310
        %513 = vmatprep.subr.mxu0 %v315
        %514 = vmatpush1.msra.mxu0 %v314
        %515 = vmatprep.subr.mxu0 %v319
        %516 = vmatpush1.msra.mxu0 %v318
        %517 = vmatprep.subr.mxu0 %v323
        %518 = vmatpush1.msra.mxu0 %v322
        %519 = vmatprep.subr.mxu0 %v327
        %520 = vmatpush1.msra.mxu0 %v326
        %521 = vmatprep.subr.mxu0 %v331
        %522 = vmatpush1.msra.mxu0 %v330
        %523 = vmatprep.subr.mxu0 %v335
        %524 = vmatpush1.msra.mxu0 %v334
        %525 = vmatprep.subr.mxu0 %v339
        %526 = vmatpush1.msra.mxu0 %v338
        %527 = vmatprep.subr.mxu0 %v343
        %528 = vmatpush1.msra.mxu0 %v342
        %529 = vmatprep.subr.mxu0 %v347
        %530 = vmatpush1.msra.mxu0 %v346
        %531 = vmatprep.subr.mxu0 %v351
        %532 = vmatpush1.msra.mxu0 %v350
        %533 = vmatprep.subr.mxu0 %v355
        %534 = vmatpush1.msra.mxu0 %v354
        %535 = vmatprep.subr.mxu0 %v359
        %536 = vmatpush1.msra.mxu0 %v358
        %537 = vmatprep.subr.mxu0 %v363
        %538 = vmatpush1.msra.mxu0 %v362
        %539 = vmatprep.subr.mxu0 %v367
        %540 = vmatpush1.msra.mxu0 %v366
        %541 = vmatprep.subr.mxu0 %v371
        %542 = vmatpush1.msra.mxu0 %v370
        %543 = vmatprep.subr.mxu0 %v375
        %544 = vmatpush1.msra.mxu0 %v374
        %545 = vmatprep.subr.mxu0 %v379
        %546 = vmatpush1.msra.mxu0 %v378
        %547 = vmatprep.subr.mxu0 %v383
        %548 = vmatpush1.msra.mxu0 %v382
        %549 = vmatprep.subr.mxu0 %v387
        %550 = vmatpush1.msra.mxu0 %v386
        %551 = vmatprep.subr.mxu0 %v391
        %552 = vmatpush1.msra.mxu0 %v390
        %553 = vmatprep.subr.mxu0 %v395
        %554 = vmatpush1.msra.mxu0 %v394
        %555 = vmatprep.subr.mxu0 %v399
        %556 = vmatpush1.msra.mxu0 %v398
        %557 = vmatprep.mubr.f32.mxu0 %v271
        %558 = vmatmul.mubr.f32.gmra.mrb[0].mxu0 %v270
        %v559 = vpop.f32.mrb[0].mxu0
        %v560 = vadd.f32 %v413, %v559
        %v561 = vpop.f32.mrb[0].mxu0
        %v562 = vadd.f32 %v417, %v561
        %563 = vdwg.mxu0
        %v564 = vmax.f32 %v489, 0.0
        %v565 = vmax.f32 %v491, 0.0
        %v566 = vmax.f32 %v560, 0.0
        %v567 = vmax.f32 %v562, 0.0
        %v568 = vld [vmem:[#allocation7] sm:$0xff]
        %v569 = vld [vmem:[#allocation7 + $0x8] sm:$0xff]
        %v570 = vld [vmem:[#allocation7 + $0x10] sm:$0xff]
        %v571 = vld [vmem:[#allocation7 + $0x18] sm:$0xff]
        %v572 = vld [vmem:[#allocation7 + $0x20] sm:$0xff]
        %v573 = vld [vmem:[#allocation7 + $0x28] sm:$0xff]
        %v574 = vld [vmem:[#allocation7 + $0x30] sm:$0xff]
        %v575 = vld [vmem:[#allocation7 + $0x38] sm:$0xff]
        %v576 = vld [vmem:[#allocation7 + $0x40] sm:$0xff]
        %v577 = vld [vmem:[#allocation7 + $0x48] sm:$0xff]
        %v578 = vld [vmem:[#allocation7 + $0x50] sm:$0xff]
        %v579 = vld [vmem:[#allocation7 + $0x58] sm:$0xff]
        %v580 = vld [vmem:[#allocation7 + $0x60] sm:$0xff]
        %v581 = vld [vmem:[#allocation7 + $0x68] sm:$0xff]
        %v582 = vld [vmem:[#allocation7 + $0x70] sm:$0xff]
        %v583 = vld [vmem:[#allocation7 + $0x78] sm:$0xff]
        %v584 = vld [vmem:[#allocation7 + $0x80] sm:$0xff]
        %v585 = vld [vmem:[#allocation7 + $0x88] sm:$0xff]
        %v586 = vld [vmem:[#allocation7 + $0x90] sm:$0xff]
        %v587 = vld [vmem:[#allocation7 + $0x98] sm:$0xff]
        %v588 = vld [vmem:[#allocation7 + $0xa0] sm:$0xff]
        %v589 = vld [vmem:[#allocation7 + $0xa8] sm:$0xff]
        %v590 = vld [vmem:[#allocation7 + $0xb0] sm:$0xff]
        %v591 = vld [vmem:[#allocation7 + $0xb8] sm:$0xff]
        %v592 = vld [vmem:[#allocation7 + $0xc0] sm:$0xff]
        %v593 = vld [vmem:[#allocation7 + $0xc8] sm:$0xff]
        %v594 = vld [vmem:[#allocation7 + $0xd0] sm:$0xff]
        %v595 = vld [vmem:[#allocation7 + $0xd8] sm:$0xff]
        %v596 = vld [vmem:[#allocation7 + $0xe0] sm:$0xff]
        %v597 = vld [vmem:[#allocation7 + $0xe8] sm:$0xff]
        %v598 = vld [vmem:[#allocation7 + $0xf0] sm:$0xff]
        %v599 = vld [vmem:[#allocation7 + $0xf8] sm:$0xff]
        %v600 = vld [vmem:[#allocation7 + $0x100] sm:$0xff]
        %v601 = vld [vmem:[#allocation7 + $0x108] sm:$0xff]
        %v602 = vld [vmem:[#allocation7 + $0x110] sm:$0xff]
        %v603 = vld [vmem:[#allocation7 + $0x118] sm:$0xff]
        %v604 = vld [vmem:[#allocation7 + $0x120] sm:$0xff]
        %v605 = vld [vmem:[#allocation7 + $0x128] sm:$0xff]
        %v606 = vld [vmem:[#allocation7 + $0x130] sm:$0xff]
        %v607 = vld [vmem:[#allocation7 + $0x138] sm:$0xff]
        %v608 = vld [vmem:[#allocation7 + $0x140] sm:$0xff]
        %v609 = vld [vmem:[#allocation7 + $0x148] sm:$0xff]
        %v610 = vld [vmem:[#allocation7 + $0x150] sm:$0xff]
        %v611 = vld [vmem:[#allocation7 + $0x158] sm:$0xff]
        %v612 = vld [vmem:[#allocation7 + $0x160] sm:$0xff]
        %v613 = vld [vmem:[#allocation7 + $0x168] sm:$0xff]
        %v614 = vld [vmem:[#allocation7 + $0x170] sm:$0xff]
        %v615 = vld [vmem:[#allocation7 + $0x178] sm:$0xff]
        %v616 = vld [vmem:[#allocation7 + $0x180] sm:$0xff]
        %v617 = vld [vmem:[#allocation7 + $0x188] sm:$0xff]
        %v618 = vld [vmem:[#allocation7 + $0x190] sm:$0xff]
        %v619 = vld [vmem:[#allocation7 + $0x198] sm:$0xff]
        %v620 = vld [vmem:[#allocation7 + $0x1a0] sm:$0xff]
        %v621 = vld [vmem:[#allocation7 + $0x1a8] sm:$0xff]
        %v622 = vld [vmem:[#allocation7 + $0x1b0] sm:$0xff]
        %v623 = vld [vmem:[#allocation7 + $0x1b8] sm:$0xff]
        %v624 = vld [vmem:[#allocation7 + $0x1c0] sm:$0xff]
        %v625 = vld [vmem:[#allocation7 + $0x1c8] sm:$0xff]
        %v626 = vld [vmem:[#allocation7 + $0x1d0] sm:$0xff]
        %v627 = vld [vmem:[#allocation7 + $0x1d8] sm:$0xff]
        %v628 = vld [vmem:[#allocation7 + $0x1e0] sm:$0xff]
        %v629 = vld [vmem:[#allocation7 + $0x1e8] sm:$0xff]
        %v630 = vld [vmem:[#allocation7 + $0x1f0] sm:$0xff]
        %v631 = vld [vmem:[#allocation7 + $0x1f8] sm:$0xff]
        %v632 = vld [vmem:[%s4] sm:$0x1]
        %v634 = vlaneseq
        %v635 = vshrl.u32 %v634, 7
        %v636 = vsub.s32 0, %v635
        %v637 = vrot.slane %v632, %v636
        %639 = vmatprep.subr.mxu0 0.0
        %640 = vmatpush1.msra.mxu0 %v568
        %641 = vmatprep.subr.mxu0 0.0
        %642 = vmatpush1.msra.mxu0 %v569
        %643 = vmatprep.subr.mxu0 0.0
        %644 = vmatpush1.msra.mxu0 %v570
        %645 = vmatprep.subr.mxu0 0.0
        %646 = vmatpush1.msra.mxu0 %v571
        %647 = vmatprep.subr.mxu0 0.0
        %648 = vmatpush1.msra.mxu0 %v572
        %649 = vmatprep.subr.mxu0 0.0
        %650 = vmatpush1.msra.mxu0 %v573
        %651 = vmatprep.subr.mxu0 0.0
        %652 = vmatpush1.msra.mxu0 %v574
        %653 = vmatprep.subr.mxu0 0.0
        %654 = vmatpush1.msra.mxu0 %v575
        %655 = vmatprep.subr.mxu0 0.0
        %656 = vmatpush1.msra.mxu0 %v576
        %657 = vmatprep.subr.mxu0 0.0
        %658 = vmatpush1.msra.mxu0 %v577
        %659 = vmatprep.subr.mxu0 0.0
        %660 = vmatpush1.msra.mxu0 %v578
        %661 = vmatprep.subr.mxu0 0.0
        %662 = vmatpush1.msra.mxu0 %v579
        %663 = vmatprep.subr.mxu0 0.0
        %664 = vmatpush1.msra.mxu0 %v580
        %665 = vmatprep.subr.mxu0 0.0
        %666 = vmatpush1.msra.mxu0 %v581
        %667 = vmatprep.subr.mxu0 0.0
        %668 = vmatpush1.msra.mxu0 %v582
        %669 = vmatprep.subr.mxu0 0.0
        %670 = vmatpush1.msra.mxu0 %v583
        %671 = vmatprep.subr.mxu0 0.0
        %672 = vmatpush1.msra.mxu0 %v584
        %673 = vmatprep.subr.mxu0 0.0
        %674 = vmatpush1.msra.mxu0 %v585
        %675 = vmatprep.subr.mxu0 0.0
        %676 = vmatpush1.msra.mxu0 %v586
        %677 = vmatprep.subr.mxu0 0.0
        %678 = vmatpush1.msra.mxu0 %v587
        %679 = vmatprep.subr.mxu0 0.0
        %680 = vmatpush1.msra.mxu0 %v588
        %681 = vmatprep.subr.mxu0 0.0
        %682 = vmatpush1.msra.mxu0 %v589
        %683 = vmatprep.subr.mxu0 0.0
        %684 = vmatpush1.msra.mxu0 %v590
        %685 = vmatprep.subr.mxu0 0.0
        %686 = vmatpush1.msra.mxu0 %v591
        %687 = vmatprep.subr.mxu0 0.0
        %688 = vmatpush1.msra.mxu0 %v592
        %689 = vmatprep.subr.mxu0 0.0
        %690 = vmatpush1.msra.mxu0 %v593
        %691 = vmatprep.subr.mxu0 0.0
        %692 = vmatpush1.msra.mxu0 %v594
        %693 = vmatprep.subr.mxu0 0.0
        %694 = vmatpush1.msra.mxu0 %v595
        %695 = vmatprep.subr.mxu0 0.0
        %696 = vmatpush1.msra.mxu0 %v596
        %697 = vmatprep.subr.mxu0 0.0
        %698 = vmatpush1.msra.mxu0 %v597
        %699 = vmatprep.subr.mxu0 0.0
        %700 = vmatpush1.msra.mxu0 %v598
        %701 = vmatprep.subr.mxu0 0.0
        %702 = vmatpush1.msra.mxu0 %v599
        %703 = vmatprep.mubr.f32.mxu0 %v565
        %704 = vmatmul.mubr.f32.gmra.mrb[0].mxu0 %v564
        %v705 = vpop.f32.mrb[0].mxu0
        %v706 = vadd.f32 %v637, %v705
        %v707 = vpop.f32.mrb[0].mxu0
        %708 = vdwg.mxu0
        %709 = vmatprep.subr.mxu0 0.0
        %710 = vmatpush1.msra.mxu0 %v600
        %711 = vmatprep.subr.mxu0 0.0
        %712 = vmatpush1.msra.mxu0 %v601
        %713 = vmatprep.subr.mxu0 0.0
        %714 = vmatpush1.msra.mxu0 %v602
        %715 = vmatprep.subr.mxu0 0.0
        %716 = vmatpush1.msra.mxu0 %v603
        %717 = vmatprep.subr.mxu0 0.0
        %718 = vmatpush1.msra.mxu0 %v604
        %719 = vmatprep.subr.mxu0 0.0
        %720 = vmatpush1.msra.mxu0 %v605
        %721 = vmatprep.subr.mxu0 0.0
        %722 = vmatpush1.msra.mxu0 %v606
        %723 = vmatprep.subr.mxu0 0.0
        %724 = vmatpush1.msra.mxu0 %v607
        %725 = vmatprep.subr.mxu0 0.0
        %726 = vmatpush1.msra.mxu0 %v608
        %727 = vmatprep.subr.mxu0 0.0
        %728 = vmatpush1.msra.mxu0 %v609
        %729 = vmatprep.subr.mxu0 0.0
        %730 = vmatpush1.msra.mxu0 %v610
        %731 = vmatprep.subr.mxu0 0.0
        %732 = vmatpush1.msra.mxu0 %v611
        %733 = vmatprep.subr.mxu0 0.0
        %734 = vmatpush1.msra.mxu0 %v612
        %735 = vmatprep.subr.mxu0 0.0
        %736 = vmatpush1.msra.mxu0 %v613
        %737 = vmatprep.subr.mxu0 0.0
        %738 = vmatpush1.msra.mxu0 %v614
        %739 = vmatprep.subr.mxu0 0.0
        %740 = vmatpush1.msra.mxu0 %v615
        %741 = vmatprep.subr.mxu0 0.0
        %742 = vmatpush1.msra.mxu0 %v616
        %743 = vmatprep.subr.mxu0 0.0
        %744 = vmatpush1.msra.mxu0 %v617
        %745 = vmatprep.subr.mxu0 0.0
        %746 = vmatpush1.msra.mxu0 %v618
        %747 = vmatprep.subr.mxu0 0.0
        %748 = vmatpush1.msra.mxu0 %v619
        %749 = vmatprep.subr.mxu0 0.0
        %750 = vmatpush1.msra.mxu0 %v620
        %751 = vmatprep.subr.mxu0 0.0
        %752 = vmatpush1.msra.mxu0 %v621
        %753 = vmatprep.subr.mxu0 0.0
        %754 = vmatpush1.msra.mxu0 %v622
        %755 = vmatprep.subr.mxu0 0.0
        %756 = vmatpush1.msra.mxu0 %v623
        %757 = vmatprep.subr.mxu0 0.0
        %758 = vmatpush1.msra.mxu0 %v624
        %759 = vmatprep.subr.mxu0 0.0
        %760 = vmatpush1.msra.mxu0 %v625
        %761 = vmatprep.subr.mxu0 0.0
        %762 = vmatpush1.msra.mxu0 %v626
        %763 = vmatprep.subr.mxu0 0.0
        %764 = vmatpush1.msra.mxu0 %v627
        %765 = vmatprep.subr.mxu0 0.0
        %766 = vmatpush1.msra.mxu0 %v628
        %767 = vmatprep.subr.mxu0 0.0
        %768 = vmatpush1.msra.mxu0 %v629
        %769 = vmatprep.subr.mxu0 0.0
        %770 = vmatpush1.msra.mxu0 %v630
        %771 = vmatprep.subr.mxu0 0.0
        %772 = vmatpush1.msra.mxu0 %v631
        %773 = vmatprep.mubr.f32.mxu0 %v567
        %774 = vmatmul.mubr.f32.gmra.mrb[0].mxu0 %v566
        %v775 = vpop.f32.mrb[0].mxu0
        %v776 = vadd.f32 %v706, %v775
        %v777 = vpop.f32.mrb[0].mxu0
        %778 = vdwg.mxu0
        %779 = vst [vmem:[%s269] sm:$0xff] %v776
        %s780 = sand.u32 %s141, 1
        %s781 = scalar_lea.sflag [#allocation4], %s780
        %s782 = sand.u32 %s141, 1
        %s783 = smul.addr %s782, 8
        %s784 = scalar_lea.vmem [#allocation8], %s783
        // Predicated region
        $region53: #{tpu_custom_call.1} parent=39 // pred_check
          %p785 = pneg %p151
        $region54: #{tpu_custom_call.1} parent=39 // pred_check_branch
          %787 = sbr.rel (%p785) target = $region56
        $region55: #{tpu_custom_call.1} parent=39 // pred_region
          %s789 = ssub.s32 128, 128
          %790 = vsyncadd %s781, %s789
          %s791 = smul.addr %s23, 128
          %s792 = scalar_lea.hbm %s5, %s791
          %s794 = sshll.u32 %s784, 4
          %s795 = int_to_ptr.vmem [resolvable:$true] %s794
          %797 = dma.vmem_to_hbm [thread:$0]  %s795, 128, %s792, %s781
        $region56: #{tpu_custom_call.1} parent=39 // pred_fallthru
          _
      $region40: #{tpu_custom_call.1} parent=5 // pred_fallthru
        _
      %p798 = scmp.le.s32.totalorder 2, %s18
      // Predicated region
      $region57: #{tpu_custom_call.1} parent=5 // pred_check
        %p799 = pneg %p798
      $region58: #{tpu_custom_call.1} parent=5 // pred_check_branch
        %801 = sbr.rel (%p799) target = $region60
      $region59: #{tpu_custom_call.1} parent=5 // pred_region
        %s802 = ssub.s32 %s18, 2
        // Predicated region
        $region61: #{tpu_custom_call.1} parent=59 // pred_check
          %p803 = pneg %p157
        $region62: #{tpu_custom_call.1} parent=59 // pred_check_branch
          %805 = sbr.rel (%p803) target = $region64
        $region63: #{tpu_custom_call.1} parent=59 // pred_region
          %s806 = sand.u32 %s142, 1
          %s807 = scalar_lea.sflag [#allocation4], %s806
          %s808 = sand.u32 %s142, 1
          %s809 = smul.addr %s808, 8
          %s810 = scalar_lea.vmem [#allocation8], %s809
          %811 = dma.done %s807, 128
        $region64: #{tpu_custom_call.1} parent=59 // pred_fallthru
          _
      $region60: #{tpu_custom_call.1} parent=5 // pred_fallthru
        _
    $region6: #{tpu_custom_call.1} parent=1 // loop_footer
      %s22 = sadd.s32 1, %s18
    $region7: #{tpu_custom_call.1} parent=1 // loop_footer_branch
      %17 = sbr.rel target = $region3
    $region8: #{tpu_custom_call.1} parent=1 // loop_exit
      _
    %812 = vsyncpa [#allocation3], 1
    %s813 = scalar_lea.sflag [#allocation3], 1
    %814 = vsyncpa %s813, 1
    %815 = vsyncpa [#allocation6], 1
    %816 = vsyncpa [#allocation4], 1
    %s817 = scalar_lea.sflag [#allocation4], 1
    %818 = vsyncpa %s817, 1

</llo_original>
